<compile_context>
chip_gen: v5e
topology: v5e:2x2
jax: 0.10.0
libtpu: 0.0.40
codegen_flags: <defaults>
</compile_context>

<pallas_src>
import functools

import jax
import jax.numpy as jnp
from jax.experimental import pallas as pl
from jax.experimental.pallas import tpu as pltpu

LOG_STD_MAX = 2.0
LOG_STD_MIN = -20.0

HIDDEN = 256
LANE = 128          # TPU lane width; packed-head output width
HALF = LANE // 2    # mean lanes [0,64), logstd lanes [64,128)

_LS_SCALE = 0.5 * (LOG_STD_MAX - LOG_STD_MIN)      # 11.0
_LS_BIAS = LOG_STD_MIN + _LS_SCALE                 # -9.0


def _round_up(v, m):
    return (v + m - 1) // m * m


def _cdiv(a, b):
    return -(-a // b)


def actor_kernel(x_ref,
                 w1_ref, b1_ref,
                 w2_ref, b2_ref,
                 w3_ref, b3_ref,
                 wh_ref, bh_ref,
                 out_ref):
    cdt = w1_ref.dtype                         # MXU operand dtype (bf16 default, f32 optional)
    x = x_ref[...].astype(cdt)

    # backbone: Linear -> ReLU, three times (MXU matmul, f32 accumulate, f32 epilogue)
    h = jnp.dot(x, w1_ref[...], preferred_element_type=jnp.float32) + b1_ref[...]
    h = jnp.maximum(h, 0.0)
    h = jnp.dot(h.astype(cdt), w2_ref[...], preferred_element_type=jnp.float32) + b2_ref[...]
    h = jnp.maximum(h, 0.0)
    h = jnp.dot(h.astype(cdt), w3_ref[...], preferred_element_type=jnp.float32) + b3_ref[...]
    h = jnp.maximum(h, 0.0)

    # fused + packed heads: lanes [0,64) = mean, lanes [64,128) = logstd
    y = jnp.dot(h.astype(cdt), wh_ref[...], preferred_element_type=jnp.float32) + bh_ref[...]

    # logstd epilogue folded to a single affine of tanh (tanh on EUP, select on VPU,
    # no cross-lane slicing).  Padded lanes end up at -9 but are sliced off in the wrapper.
    lane = jax.lax.broadcasted_iota(jnp.int32, y.shape, 1)
    ls = _LS_SCALE * jnp.tanh(y) + _LS_BIAS
    out_ref[...] = jnp.where(lane >= HALF, ls, y).astype(out_ref.dtype)


def prepare_params(params, use_bf16=True):
    """One-time weight prep: fuse + lane-pack the two heads and cast MXU operands.

    Done once (outside the per-step forward) so no padded/cast weight copies are
    rebuilt in HBM on every call."""
    (w1, b1, w2, b2, w3, b3, wm, bm, wl, bl) = params
    A = wm.shape[1]
    assert A <= HALF, "act_dim must fit in half a lane tile (<=64)"
    # TODO(synk): act_dim > 64 would need the unpacked two-output head layout.

    cdt = jnp.bfloat16 if use_bf16 else jnp.float32

    # packed head weight: [HIDDEN, 128] = [mean | 0-pad to 64 | logstd | 0-pad to 64]
    wh = jnp.concatenate(
        [jnp.pad(wm, ((0, 0), (0, HALF - A))),
         jnp.pad(wl, ((0, 0), (0, HALF - A)))], axis=1).astype(cdt)
    bh = jnp.concatenate(
        [jnp.pad(bm, ((0, 0), (0, HALF - A))),
         jnp.pad(bl, ((0, 0), (0, HALF - A)))], axis=1)            # f32 [1, 128]

    return (w1.astype(cdt), b1, w2.astype(cdt), b2, w3.astype(cdt), b3, wh, bh)


@functools.partial(jax.jit, static_argnames=("act_dim", "tile_b"))
def actor_forward(x, prepped, act_dim, tile_b=1024):
    """Actor forward. x: [B, input_dim] f32. Returns (mean, log_std), each [B, act_dim] f32."""
    (w1, b1, w2, b2, w3, b3, wh, bh) = prepped
    B, D = x.shape
    assert w1.shape[0] == D

    cdt = w1.dtype
    row_align = 16 if cdt == jnp.bfloat16 else 8   # bf16 vreg holds (16,128) sublanes

    # batch tiling: big tiles to amortize per-step overhead, but keep >=2 grid steps
    # when the batch allows it so v7x's second TensorCore gets half the "parallel" axis.
    tile_b_eff = min(tile_b, _round_up(B, row_align))
    if B > row_align:
        tile_b_eff = min(tile_b_eff, _round_up(_cdiv(B, 2), row_align))
    B_pad = _round_up(B, tile_b_eff)
    x_p = jnp.pad(x, ((0, B_pad - B), (0, 0)))
    grid = (B_pad // tile_b_eff,)

    # x block keeps the native feature dim (D == full array dim -> legal, unpadded DMA)
    x_spec = pl.BlockSpec((tile_b_eff, D), lambda i: (i, 0))
    full = lambda arr: pl.BlockSpec(arr.shape, lambda i: (0, 0))   # weights resident
    out_spec = pl.BlockSpec((tile_b_eff, LANE), lambda i: (i, 0))  # lane-dense packed output

    out_p = pl.pallas_call(
        actor_kernel,
        out_shape=jax.ShapeDtypeStruct((B_pad, LANE), jnp.float32),
        grid_spec=pltpu.PrefetchScalarGridSpec(
            num_scalar_prefetch=0,
            grid=grid,
            in_specs=[
                x_spec,
                full(w1), full(b1),
                full(w2), full(b2),
                full(w3), full(b3),
                full(wh), full(bh),
            ],
            out_specs=out_spec,
        ),
        compiler_params=pltpu.CompilerParams(
            dimension_semantics=("parallel",)),
    )(x_p, w1, b1, w2, b2, w3, b3, wh, bh)

    mean = out_p[:B, :act_dim]
    logstd = out_p[:B, HALF:HALF + act_dim]
    return mean, logstd


def init_params(key, input_dim, act_dim):
    """Deterministic synthetic parameter init (orthogonal-ish via QR, like layer_init)."""
    def ortho(k, shape, gain):
        a = jax.random.normal(k, (max(shape), max(shape)), dtype=jnp.float32)
        q, _ = jnp.linalg.qr(a)
        return gain * q[:shape[0], :shape[1]].astype(jnp.float32)

    ks = jax.random.split(key, 5)
    sqrt2 = float(jnp.sqrt(2.0))
    w1 = ortho(ks[0], (input_dim, HIDDEN), sqrt2)   # [in, out]
    b1 = jnp.zeros((1, HIDDEN), jnp.float32)
    w2 = ortho(ks[1], (HIDDEN, HIDDEN), sqrt2)
    b2 = jnp.zeros((1, HIDDEN), jnp.float32)
    w3 = ortho(ks[2], (HIDDEN, HIDDEN), sqrt2)
    b3 = jnp.zeros((1, HIDDEN), jnp.float32)
    wm = ortho(ks[3], (HIDDEN, act_dim), 0.01)
    bm = jnp.zeros((1, act_dim), jnp.float32)
    wl = ortho(ks[4], (HIDDEN, act_dim), 0.01)
    bl = jnp.zeros((1, act_dim), jnp.float32)
    return (w1, b1, w2, b2, w3, b3, wm, bm, wl, bl)


def actor_forward_ref(x, params):
    """Pure-JAX reference for correctness checking."""
    (w1, b1, w2, b2, w3, b3, wm, bm, wl, bl) = params
    h = jax.nn.relu(x @ w1 + b1)
    h = jax.nn.relu(h @ w2 + b2)
    h = jax.nn.relu(h @ w3 + b3)
    mean = h @ wm + bm
    logstd = jnp.tanh(h @ wl + bl)
    logstd = LOG_STD_MIN + 0.5 * (LOG_STD_MAX - LOG_STD_MIN) * (logstd + 1.0)
    return mean, logstd


if __name__ == "__main__":
    key = jax.random.PRNGKey(0)
    k_x, k_p, k_x2 = jax.random.split(key, 3)

    input_dim = 32   # flattened observation dim (args.actor_input == 'obs')
    act_dim = 8      # prod(action_space.shape)
    params = init_params(k_p, input_dim, act_dim)

    prepped_f32 = prepare_params(params, use_bf16=False)   # exact-ish check path
    prepped_bf16 = prepare_params(params)                  # default production path (bf16 MXU)

    # --- small batch (policy-eval-sized), f32 operands, tolerance check ---
    x_small = jax.random.normal(k_x, (8, input_dim), dtype=jnp.float32)
    mean, logstd = actor_forward(x_small, prepped_f32, act_dim=act_dim)
    jax.block_until_ready((mean, logstd))
    mean_r, logstd_r = actor_forward_ref(x_small, params)
    assert jnp.allclose(mean, mean_r, atol=1e-4, rtol=1e-4)
    assert jnp.allclose(logstd, logstd_r, atol=1e-4, rtol=1e-4)

    # --- larger batch: >=2 "parallel" tiles (exercises tiling / megacore sharding) ---
    x_big = jax.random.normal(k_x2, (512, input_dim), dtype=jnp.float32)
    mean_b, logstd_b = actor_forward(x_big, prepped_f32, act_dim=act_dim)
    jax.block_until_ready((mean_b, logstd_b))
    mean_br, logstd_br = actor_forward_ref(x_big, params)
    assert jnp.allclose(mean_b, mean_br, atol=1e-4, rtol=1e-4)
    assert jnp.allclose(logstd_b, logstd_br, atol=1e-4, rtol=1e-4)

    # --- default bf16 MXU path (v5e/v6e/v7x native): looser tolerance ---
    mean_bf, logstd_bf = actor_forward(x_big, prepped_bf16, act_dim=act_dim)
    jax.block_until_ready((mean_bf, logstd_bf))
    assert jnp.allclose(mean_bf, mean_br, atol=0.1, rtol=0.1)
    assert jnp.allclose(logstd_bf, logstd_br, atol=0.5, rtol=0.1)

    print("KERNEL_OK")
</pallas_src>

<mosaic_0001>
module attributes {stable_mosaic.version = 11 : i64} {
  func.func @actor_kernel(%arg0: i32, %arg1: memref<8x32xf32, #tpu.memory_space<vmem>>, %arg2: memref<32x256xf32, #tpu.memory_space<vmem>>, %arg3: memref<1x256xf32, #tpu.memory_space<vmem>>, %arg4: memref<256x256xf32, #tpu.memory_space<vmem>>, %arg5: memref<1x256xf32, #tpu.memory_space<vmem>>, %arg6: memref<256x256xf32, #tpu.memory_space<vmem>>, %arg7: memref<1x256xf32, #tpu.memory_space<vmem>>, %arg8: memref<256x128xf32, #tpu.memory_space<vmem>>, %arg9: memref<1x128xf32, #tpu.memory_space<vmem>>, %arg10: memref<8x128xf32, #tpu.memory_space<vmem>>) attributes {dimension_semantics = [#tpu.dimension_semantics<parallel>], iteration_bounds = array<i64: 1>, scalar_prefetch = 0 : i64, scratch_operands = 0 : i64, tpu.core_type = #tpu.core_type<tc>, window_params = [{transform_indices = @transform_0, window_bounds = array<i64: 8, 32>}, {pipeline_mode = #tpu.pipeline_mode<synchronous>, transform_indices = @transform_1, window_bounds = array<i64: 32, 256>}, {pipeline_mode = #tpu.pipeline_mode<synchronous>, transform_indices = @transform_2, window_bounds = array<i64: 1, 256>}, {pipeline_mode = #tpu.pipeline_mode<synchronous>, transform_indices = @transform_3, window_bounds = array<i64: 256, 256>}, {pipeline_mode = #tpu.pipeline_mode<synchronous>, transform_indices = @transform_4, window_bounds = array<i64: 1, 256>}, {pipeline_mode = #tpu.pipeline_mode<synchronous>, transform_indices = @transform_5, window_bounds = array<i64: 256, 256>}, {pipeline_mode = #tpu.pipeline_mode<synchronous>, transform_indices = @transform_6, window_bounds = array<i64: 1, 256>}, {pipeline_mode = #tpu.pipeline_mode<synchronous>, transform_indices = @transform_7, window_bounds = array<i64: 256, 128>}, {pipeline_mode = #tpu.pipeline_mode<synchronous>, transform_indices = @transform_8, window_bounds = array<i64: 1, 128>}, {transform_indices = @transform_9, window_bounds = array<i64: 8, 128>}]} {
    %c0 = arith.constant 0 : index
    %c0_0 = arith.constant 0 : index
    %0 = vector.load %arg1[%c0, %c0_0] : memref<8x32xf32, #tpu.memory_space<vmem>>, vector<8x32xf32>
    %c0_1 = arith.constant 0 : index
    %c0_2 = arith.constant 0 : index
    %1 = vector.load %arg2[%c0_1, %c0_2] : memref<32x256xf32, #tpu.memory_space<vmem>>, vector<32x256xf32>
    %cst = arith.constant dense<0.000000e+00> : vector<8x256xf32>
    %2 = tpu.matmul %0, %1, %cst {dimension_numbers = #tpu.dot_dimension_numbers<[1], [0], [0], [1], [0, 0, 1, 1], [], []>} : vector<8x32xf32>, vector<32x256xf32>, vector<8x256xf32> -> vector<8x256xf32>
    %c0_3 = arith.constant 0 : index
    %c0_4 = arith.constant 0 : index
    %3 = vector.load %arg3[%c0_3, %c0_4] : memref<1x256xf32, #tpu.memory_space<vmem>>, vector<1x256xf32>
    %4 = vector.broadcast %3 : vector<1x256xf32> to vector<8x256xf32>
    %5 = arith.addf %2, %4 : vector<8x256xf32>
    %cst_5 = arith.constant 0.000000e+00 : f32
    %6 = vector.broadcast %cst_5 : f32 to vector<8x256xf32>
    %7 = arith.maximumf %5, %6 : vector<8x256xf32>
    %c0_6 = arith.constant 0 : index
    %c0_7 = arith.constant 0 : index
    %8 = vector.load %arg4[%c0_6, %c0_7] : memref<256x256xf32, #tpu.memory_space<vmem>>, vector<256x256xf32>
    %cst_8 = arith.constant dense<0.000000e+00> : vector<8x256xf32>
    %9 = tpu.matmul %7, %8, %cst_8 {dimension_numbers = #tpu.dot_dimension_numbers<[1], [0], [0], [1], [0, 0, 1, 1], [], []>} : vector<8x256xf32>, vector<256x256xf32>, vector<8x256xf32> -> vector<8x256xf32>
    %c0_9 = arith.constant 0 : index
    %c0_10 = arith.constant 0 : index
    %10 = vector.load %arg5[%c0_9, %c0_10] : memref<1x256xf32, #tpu.memory_space<vmem>>, vector<1x256xf32>
    %11 = vector.broadcast %10 : vector<1x256xf32> to vector<8x256xf32>
    %12 = arith.addf %9, %11 : vector<8x256xf32>
    %cst_11 = arith.constant 0.000000e+00 : f32
    %13 = vector.broadcast %cst_11 : f32 to vector<8x256xf32>
    %14 = arith.maximumf %12, %13 : vector<8x256xf32>
    %c0_12 = arith.constant 0 : index
    %c0_13 = arith.constant 0 : index
    %15 = vector.load %arg6[%c0_12, %c0_13] : memref<256x256xf32, #tpu.memory_space<vmem>>, vector<256x256xf32>
    %cst_14 = arith.constant dense<0.000000e+00> : vector<8x256xf32>
    %16 = tpu.matmul %14, %15, %cst_14 {dimension_numbers = #tpu.dot_dimension_numbers<[1], [0], [0], [1], [0, 0, 1, 1], [], []>} : vector<8x256xf32>, vector<256x256xf32>, vector<8x256xf32> -> vector<8x256xf32>
    %c0_15 = arith.constant 0 : index
    %c0_16 = arith.constant 0 : index
    %17 = vector.load %arg7[%c0_15, %c0_16] : memref<1x256xf32, #tpu.memory_space<vmem>>, vector<1x256xf32>
    %18 = vector.broadcast %17 : vector<1x256xf32> to vector<8x256xf32>
    %19 = arith.addf %16, %18 : vector<8x256xf32>
    %cst_17 = arith.constant 0.000000e+00 : f32
    %20 = vector.broadcast %cst_17 : f32 to vector<8x256xf32>
    %21 = arith.maximumf %19, %20 : vector<8x256xf32>
    %c0_18 = arith.constant 0 : index
    %c0_19 = arith.constant 0 : index
    %22 = vector.load %arg8[%c0_18, %c0_19] : memref<256x128xf32, #tpu.memory_space<vmem>>, vector<256x128xf32>
    %cst_20 = arith.constant dense<0.000000e+00> : vector<8x128xf32>
    %23 = tpu.matmul %21, %22, %cst_20 {dimension_numbers = #tpu.dot_dimension_numbers<[1], [0], [0], [1], [0, 0, 1, 1], [], []>} : vector<8x256xf32>, vector<256x128xf32>, vector<8x128xf32> -> vector<8x128xf32>
    %c0_21 = arith.constant 0 : index
    %c0_22 = arith.constant 0 : index
    %24 = vector.load %arg9[%c0_21, %c0_22] : memref<1x128xf32, #tpu.memory_space<vmem>>, vector<1x128xf32>
    %25 = vector.broadcast %24 : vector<1x128xf32> to vector<8x128xf32>
    %26 = arith.addf %23, %25 : vector<8x128xf32>
    %27 = tpu.iota {dimensions = array<i32: 1>} : vector<8x128xi32>
    %28 = math.tanh %26 : vector<8x128xf32>
    %cst_23 = arith.constant 1.100000e+01 : f32
    %29 = vector.broadcast %cst_23 : f32 to vector<8x128xf32>
    %30 = arith.mulf %29, %28 : vector<8x128xf32>
    %cst_24 = arith.constant -9.000000e+00 : f32
    %31 = vector.broadcast %cst_24 : f32 to vector<8x128xf32>
    %32 = arith.addf %30, %31 : vector<8x128xf32>
    %c64_i32 = arith.constant 64 : i32
    %33 = vector.broadcast %c64_i32 : i32 to vector<8x128xi32>
    %34 = arith.cmpi sge, %27, %33 : vector<8x128xi32>
    %35 = arith.select %34, %32, %26 : vector<8x128xi1>, vector<8x128xf32>
    %c0_25 = arith.constant 0 : index
    %c0_26 = arith.constant 0 : index
    %36 = vector.load %arg10[%c0_25, %c0_26] : memref<8x128xf32, #tpu.memory_space<vmem>>, vector<8x128xf32>
    tpu.vector_store %arg10[%c0_25, %c0_26], %35 {strides = array<i32>} : memref<8x128xf32, #tpu.memory_space<vmem>>, vector<8x128xf32>,
    return
  }
  func.func @transform_0(%arg0: i32) -> (i32, i32) {
    %c0_i32 = arith.constant 0 : i32
    %c0_i32_0 = arith.constant 0 : i32
    return %arg0, %c0_i32 : i32, i32
  }
  func.func @transform_1(%arg0: i32) -> (i32, i32) {
    %c0_i32 = arith.constant 0 : i32
    %c0_i32_0 = arith.constant 0 : i32
    %c0_i32_1 = arith.constant 0 : i32
    return %c0_i32, %c0_i32_0 : i32, i32
  }
  func.func @transform_2(%arg0: i32) -> (i32, i32) {
    %c0_i32 = arith.constant 0 : i32
    %c0_i32_0 = arith.constant 0 : i32
    %c0_i32_1 = arith.constant 0 : i32
    return %c0_i32, %c0_i32_0 : i32, i32
  }
  func.func @transform_3(%arg0: i32) -> (i32, i32) {
    %c0_i32 = arith.constant 0 : i32
    %c0_i32_0 = arith.constant 0 : i32
    %c0_i32_1 = arith.constant 0 : i32
    return %c0_i32, %c0_i32_0 : i32, i32
  }
  func.func @transform_4(%arg0: i32) -> (i32, i32) {
    %c0_i32 = arith.constant 0 : i32
    %c0_i32_0 = arith.constant 0 : i32
    %c0_i32_1 = arith.constant 0 : i32
    return %c0_i32, %c0_i32_0 : i32, i32
  }
  func.func @transform_5(%arg0: i32) -> (i32, i32) {
    %c0_i32 = arith.constant 0 : i32
    %c0_i32_0 = arith.constant 0 : i32
    %c0_i32_1 = arith.constant 0 : i32
    return %c0_i32, %c0_i32_0 : i32, i32
  }
  func.func @transform_6(%arg0: i32) -> (i32, i32) {
    %c0_i32 = arith.constant 0 : i32
    %c0_i32_0 = arith.constant 0 : i32
    %c0_i32_1 = arith.constant 0 : i32
    return %c0_i32, %c0_i32_0 : i32, i32
  }
  func.func @transform_7(%arg0: i32) -> (i32, i32) {
    %c0_i32 = arith.constant 0 : i32
    %c0_i32_0 = arith.constant 0 : i32
    %c0_i32_1 = arith.constant 0 : i32
    return %c0_i32, %c0_i32_0 : i32, i32
  }
  func.func @transform_8(%arg0: i32) -> (i32, i32) {
    %c0_i32 = arith.constant 0 : i32
    %c0_i32_0 = arith.constant 0 : i32
    %c0_i32_1 = arith.constant 0 : i32
    return %c0_i32, %c0_i32_0 : i32, i32
  }
  func.func @transform_9(%arg0: i32) -> (i32, i32) {
    %c0_i32 = arith.constant 0 : i32
    %c0_i32_0 = arith.constant 0 : i32
    return %arg0, %c0_i32 : i32, i32
  }
}

</mosaic_0001>

<llo_original>
// kernel: actor_forward.1
$region0: #{actor_forward.1}
  #allocation0 [shape = 'u32[]', space=smem, size = 0x4, offset = 0x4, fixed_abs, tag = 'smem constant byte address 0x4 - core index']
  #allocation1 [shape = 'u32[72,128]{1,0:T(1,128)}', space=vmem, size = 0x9000, scoped, tag = 'internal scratch']
  %s0 = inlined_call_operand.hbm [shape: f32[8,32], index: 0, kind: input, shape index: {}]
  %s1 = inlined_call_operand.hbm [shape: f32[32,256], index: 1, kind: input, shape index: {}]
  %s2 = inlined_call_operand.hbm [shape: f32[1,256], index: 2, kind: input, shape index: {}]
  %s3 = inlined_call_operand.hbm [shape: f32[256,256], index: 3, kind: input, shape index: {}]
  %s4 = inlined_call_operand.vmem [shape: f32[1,256], index: 4, kind: input, shape index: {}]
  %s5 = inlined_call_operand.hbm [shape: f32[256,256], index: 5, kind: input, shape index: {}]
  %s6 = inlined_call_operand.vmem [shape: f32[1,256], index: 6, kind: input, shape index: {}]
  %s7 = inlined_call_operand.hbm [shape: f32[256,128], index: 7, kind: input, shape index: {}]
  %s8 = inlined_call_operand.vmem [shape: f32[1,128], index: 8, kind: input, shape index: {}]
  %s9 = inlined_call_operand.vmem [shape: f32[8,128], index: 9, kind: output, shape index: {}]
  %s10 = sld [smem:[#allocation0]]
  $region70: #{actor_forward.1} parent=0
    _
  %s12 = ssub.s32 1, %s10
  %s13 = scalar_select 0, %s12, %s10
  $region1: #{actor_forward.1} parent=0
    #allocation2 [shape = 'u8[4096]{0}', space=vmem, size = 0x1000, scoped, tag = 'input window, operand 0, single buffered']
    #allocation3 [shape = 's32[1]{0}', space=sflag, size = 0x4, scoped, tag = 'scoped memory for actor_forward.1']
    #allocation4 [shape = 'u8[32768]{0}', space=vmem, size = 0x8000, scoped, tag = 'input window, operand 1, single buffered']
    #allocation5 [shape = 's32[1]{0}', space=sflag, size = 0x4, scoped, tag = 'scoped memory for actor_forward.1']
    #allocation6 [shape = 'u8[1024]{0}', space=vmem, size = 0x400, scoped, tag = 'input window, operand 2, single buffered']
    #allocation7 [shape = 'u8[262144]{0}', space=vmem, size = 0x40000, scoped, tag = 'input window, operand 3, single buffered']
    #allocation8 [shape = 's32[1]{0}', space=sflag, size = 0x4, scoped, tag = 'scoped memory for actor_forward.1']
    #allocation9 [shape = 'u8[262144]{0}', space=vmem, size = 0x40000, scoped, tag = 'input window, operand 5, single buffered']
    #allocation10 [shape = 'u8[131072]{0}', space=vmem, size = 0x20000, scoped, tag = 'input window, operand 7, single buffered']
    #allocation11 [shape = 's32[1]{0}', space=sflag, size = 0x4, scoped, tag = 'scoped memory for actor_forward.1']
    %14 = vsyncpa [#allocation3], 0
    %15 = vsyncpa [#allocation5], 0
    %16 = vsyncpa [#allocation8], 0
    %17 = vsyncpa [#allocation11], 0
    // Predicated region
    $region2: #{actor_forward.1} parent=1 // pred_check
      _
    $region3: #{actor_forward.1} parent=1 // pred_check_branch
      %19 = sbr.rel (0) target = $region5
    $region4: #{actor_forward.1} parent=1 // pred_region
      %21 = vsyncadd [#allocation3], 0
      %s23 = sshll.u32 %s0, 4
      %s24 = int_to_ptr.hbm [resolvable:$true] %s23
      %s25 = sshll.u32 [#allocation2], 4
      %s26 = int_to_ptr.vmem [resolvable:$true] %s25
      %28 = dma.hbm_to_vmem [thread:$0]  %s24, 128, %s26, [#allocation3]
    $region5: #{actor_forward.1} parent=1 // pred_fallthru
      _
    // Predicated region
    $region6: #{actor_forward.1} parent=1 // pred_check
      _
    $region7: #{actor_forward.1} parent=1 // pred_check_branch
      %30 = sbr.rel (0) target = $region9
    $region8: #{actor_forward.1} parent=1 // pred_region
      %32 = vsyncadd [#allocation5], 0
      %s33 = sshll.u32 %s1, 4
      %s34 = int_to_ptr.hbm [resolvable:$true] %s33
      %s35 = sshll.u32 [#allocation4], 4
      %s36 = int_to_ptr.vmem [resolvable:$true] %s35
      %41 = dma.hbm_to_vmem [thread:$0]  %s34, 1024, %s36, [#allocation5], 256, 256, 16
    $region9: #{actor_forward.1} parent=1 // pred_fallthru
      _
    // Predicated region
    $region10: #{actor_forward.1} parent=1 // pred_check
      _
    $region11: #{actor_forward.1} parent=1 // pred_check_branch
      %43 = sbr.rel (0) target = $region13
    $region12: #{actor_forward.1} parent=1 // pred_region
      %45 = vsyncadd [#allocation5], 0
      %s47 = sshll.u32 %s2, 4
      %s48 = int_to_ptr.hbm [resolvable:$true] %s47
      %s49 = sshll.u32 [#allocation6], 4
      %s50 = int_to_ptr.vmem [resolvable:$true] %s49
      %52 = dma.hbm_to_vmem [thread:$0]  %s48, 32, %s50, [#allocation5]
    $region13: #{actor_forward.1} parent=1 // pred_fallthru
      _
    // Predicated region
    $region14: #{actor_forward.1} parent=1 // pred_check
      _
    $region15: #{actor_forward.1} parent=1 // pred_check_branch
      %54 = sbr.rel (0) target = $region17
    $region16: #{actor_forward.1} parent=1 // pred_region
      %56 = vsyncadd [#allocation8], 0
      %s57 = sshll.u32 %s3, 4
      %s58 = int_to_ptr.hbm [resolvable:$true] %s57
      %s59 = sshll.u32 [#allocation7], 4
      %s60 = int_to_ptr.vmem [resolvable:$true] %s59
      %65 = dma.hbm_to_vmem [thread:$0]  %s58, 8192, %s60, [#allocation8], 256, 256, 16
    $region17: #{actor_forward.1} parent=1 // pred_fallthru
      _
    // Predicated region
    $region18: #{actor_forward.1} parent=1 // pred_check
      _
    $region19: #{actor_forward.1} parent=1 // pred_check_branch
      %67 = sbr.rel (0) target = $region21
    $region20: #{actor_forward.1} parent=1 // pred_region
      _
    $region21: #{actor_forward.1} parent=1 // pred_fallthru
      _
    // Predicated region
    $region22: #{actor_forward.1} parent=1 // pred_check
      _
    $region23: #{actor_forward.1} parent=1 // pred_check_branch
      %69 = sbr.rel (0) target = $region25
    $region24: #{actor_forward.1} parent=1 // pred_region
      %71 = vsyncadd [#allocation8], 0
      %s72 = sshll.u32 %s5, 4
      %s73 = int_to_ptr.hbm [resolvable:$true] %s72
      %s74 = sshll.u32 [#allocation9], 4
      %s75 = int_to_ptr.vmem [resolvable:$true] %s74
      %80 = dma.hbm_to_vmem [thread:$0]  %s73, 8192, %s75, [#allocation8], 256, 256, 16
    $region25: #{actor_forward.1} parent=1 // pred_fallthru
      _
    // Predicated region
    $region26: #{actor_forward.1} parent=1 // pred_check
      _
    $region27: #{actor_forward.1} parent=1 // pred_check_branch
      %82 = sbr.rel (0) target = $region29
    $region28: #{actor_forward.1} parent=1 // pred_region
      _
    $region29: #{actor_forward.1} parent=1 // pred_fallthru
      _
    // Predicated region
    $region30: #{actor_forward.1} parent=1 // pred_check
      _
    $region31: #{actor_forward.1} parent=1 // pred_check_branch
      %84 = sbr.rel (0) target = $region33
    $region32: #{actor_forward.1} parent=1 // pred_region
      %86 = vsyncadd [#allocation11], 0
      %s87 = sshll.u32 %s7, 4
      %s88 = int_to_ptr.hbm [resolvable:$true] %s87
      %s89 = sshll.u32 [#allocation10], 4
      %s90 = int_to_ptr.vmem [resolvable:$true] %s89
      %95 = dma.hbm_to_vmem [thread:$0]  %s88, 4096, %s90, [#allocation11], 128, 128, 8
    $region33: #{actor_forward.1} parent=1 // pred_fallthru
      _
    // Predicated region
    $region34: #{actor_forward.1} parent=1 // pred_check
      _
    $region35: #{actor_forward.1} parent=1 // pred_check_branch
      %97 = sbr.rel (0) target = $region37
    $region36: #{actor_forward.1} parent=1 // pred_region
      _
    $region37: #{actor_forward.1} parent=1 // pred_fallthru
      _
    // Predicated region
    $region38: #{actor_forward.1} parent=1 // pred_check
      _
    $region39: #{actor_forward.1} parent=1 // pred_check_branch
      %99 = sbr.rel (0) target = $region41
    $region40: #{actor_forward.1} parent=1 // pred_region
      %101 = dma.done [#allocation3], 128
    $region41: #{actor_forward.1} parent=1 // pred_fallthru
      _
    // Predicated region
    $region42: #{actor_forward.1} parent=1 // pred_check
      _
    $region43: #{actor_forward.1} parent=1 // pred_check_branch
      %103 = sbr.rel (0) target = $region45
    $region44: #{actor_forward.1} parent=1 // pred_region
      %105 = dma.done [#allocation5], 1024
    $region45: #{actor_forward.1} parent=1 // pred_fallthru
      _
    // Predicated region
    $region46: #{actor_forward.1} parent=1 // pred_check
      _
    $region47: #{actor_forward.1} parent=1 // pred_check_branch
      %107 = sbr.rel (0) target = $region49
    $region48: #{actor_forward.1} parent=1 // pred_region
      %109 = dma.done [#allocation5], 32
    $region49: #{actor_forward.1} parent=1 // pred_fallthru
      _
    // Predicated region
    $region50: #{actor_forward.1} parent=1 // pred_check
      _
    $region51: #{actor_forward.1} parent=1 // pred_check_branch
      %111 = sbr.rel (0) target = $region53
    $region52: #{actor_forward.1} parent=1 // pred_region
      %113 = dma.done [#allocation8], 8192
    $region53: #{actor_forward.1} parent=1 // pred_fallthru
      _
    // Predicated region
    $region54: #{actor_forward.1} parent=1 // pred_check
      _
    $region55: #{actor_forward.1} parent=1 // pred_check_branch
      %115 = sbr.rel (0) target = $region57
    $region56: #{actor_forward.1} parent=1 // pred_region
      %117 = dma.done [#allocation8], 8192
    $region57: #{actor_forward.1} parent=1 // pred_fallthru
      _
    // Predicated region
    $region58: #{actor_forward.1} parent=1 // pred_check
      _
    $region59: #{actor_forward.1} parent=1 // pred_check_branch
      %119 = sbr.rel (0) target = $region61
    $region60: #{actor_forward.1} parent=1 // pred_region
      %121 = dma.done [#allocation11], 4096
    $region61: #{actor_forward.1} parent=1 // pred_fallthru
      _
    %v122 = vld [vmem:[#allocation2] sm:$0xff]
    %v123 = vld [vmem:[#allocation4] sm:$0xff]
    %v124 = vld [vmem:[#allocation4 + $0x8] sm:$0xff]
    %v125 = vld [vmem:[#allocation4 + $0x10] sm:$0xff]
    %v126 = vld [vmem:[#allocation4 + $0x18] sm:$0xff]
    %v127 = vld [vmem:[#allocation4 + $0x20] sm:$0xff]
    %v128 = vld [vmem:[#allocation4 + $0x28] sm:$0xff]
    %v129 = vld [vmem:[#allocation4 + $0x30] sm:$0xff]
    %v130 = vld [vmem:[#allocation4 + $0x38] sm:$0xff]
    %v131 = vld [vmem:[#allocation6] sm:$0x3]
    %v133 = vperm.slane %v131, 0
    %v134 = vperm.slane %v131, 1
    %vm137 = vcmask 261120
    %v139 = vsel %vm137, %v122, 0
    %141 = vmatpush.msra.mxu0 0.0
    %142 = vmatpush.msra.mxu0 0.0
    %143 = vmatpush.msra.mxu0 0.0
    %144 = vmatpush.msra.mxu0 0.0
    %145 = vmatpush.msra.mxu0 0.0
    %146 = vmatpush.msra.mxu0 0.0
    %147 = vmatpush.msra.mxu0 0.0
    %148 = vmatpush.msra.mxu0 0.0
    %149 = vmatpush.msra.mxu0 0.0
    %150 = vmatpush.msra.mxu0 0.0
    %151 = vmatpush.msra.mxu0 0.0
    %152 = vmatpush.msra.mxu0 0.0
    %153 = vmatpush.msra.mxu0 %v129
    %154 = vmatpush.msra.mxu0 %v127
    %155 = vmatpush.msra.mxu0 %v125
    %156 = vmatpush.msra.mxu0 %v123
    %157 = vmatmul.f32.gmra.mxu0 %v139
    %v158 = vpop.f32.mrf.mxu0
    %v159 = vadd.f32 %v133, %v158
    %160 = vdwg.mxu0
    %161 = vmatpush.msra.mxu0 0.0
    %162 = vmatpush.msra.mxu0 0.0
    %163 = vmatpush.msra.mxu0 0.0
    %164 = vmatpush.msra.mxu0 0.0
    %165 = vmatpush.msra.mxu0 0.0
    %166 = vmatpush.msra.mxu0 0.0
    %167 = vmatpush.msra.mxu0 0.0
    %168 = vmatpush.msra.mxu0 0.0
    %169 = vmatpush.msra.mxu0 0.0
    %170 = vmatpush.msra.mxu0 0.0
    %171 = vmatpush.msra.mxu0 0.0
    %172 = vmatpush.msra.mxu0 0.0
    %173 = vmatpush.msra.mxu0 %v130
    %174 = vmatpush.msra.mxu0 %v128
    %175 = vmatpush.msra.mxu0 %v126
    %176 = vmatpush.msra.mxu0 %v124
    %177 = vmatmul.f32.gmra.mxu0 %v139
    %v178 = vpop.f32.mrf.mxu0
    %v179 = vadd.f32 %v134, %v178
    %180 = vdwg.mxu0
    %v181 = vmax.f32 %v159, 0.0
    %v182 = vmax.f32 %v179, 0.0
    %v183 = vld [vmem:[#allocation7] sm:$0xff]
    %v184 = vld [vmem:[#allocation7 + $0x8] sm:$0xff]
    %v185 = vld [vmem:[#allocation7 + $0x10] sm:$0xff]
    %v186 = vld [vmem:[#allocation7 + $0x18] sm:$0xff]
    %v187 = vld [vmem:[#allocation7 + $0x20] sm:$0xff]
    %v188 = vld [vmem:[#allocation7 + $0x28] sm:$0xff]
    %v189 = vld [vmem:[#allocation7 + $0x30] sm:$0xff]
    %v190 = vld [vmem:[#allocation7 + $0x38] sm:$0xff]
    %v191 = vld [vmem:[#allocation7 + $0x40] sm:$0xff]
    %v192 = vld [vmem:[#allocation7 + $0x48] sm:$0xff]
    %v193 = vld [vmem:[#allocation7 + $0x50] sm:$0xff]
    %v194 = vld [vmem:[#allocation7 + $0x58] sm:$0xff]
    %v195 = vld [vmem:[#allocation7 + $0x60] sm:$0xff]
    %v196 = vld [vmem:[#allocation7 + $0x68] sm:$0xff]
    %v197 = vld [vmem:[#allocation7 + $0x70] sm:$0xff]
    %v198 = vld [vmem:[#allocation7 + $0x78] sm:$0xff]
    %v199 = vld [vmem:[#allocation7 + $0x80] sm:$0xff]
    %v200 = vld [vmem:[#allocation7 + $0x88] sm:$0xff]
    %v201 = vld [vmem:[#allocation7 + $0x90] sm:$0xff]
    %v202 = vld [vmem:[#allocation7 + $0x98] sm:$0xff]
    %v203 = vld [vmem:[#allocation7 + $0xa0] sm:$0xff]
    %v204 = vld [vmem:[#allocation7 + $0xa8] sm:$0xff]
    %v205 = vld [vmem:[#allocation7 + $0xb0] sm:$0xff]
    %v206 = vld [vmem:[#allocation7 + $0xb8] sm:$0xff]
    %v207 = vld [vmem:[#allocation7 + $0xc0] sm:$0xff]
    %v208 = vld [vmem:[#allocation7 + $0xc8] sm:$0xff]
    %v209 = vld [vmem:[#allocation7 + $0xd0] sm:$0xff]
    %v210 = vld [vmem:[#allocation7 + $0xd8] sm:$0xff]
    %v211 = vld [vmem:[#allocation7 + $0xe0] sm:$0xff]
    %v212 = vld [vmem:[#allocation7 + $0xe8] sm:$0xff]
    %v213 = vld [vmem:[#allocation7 + $0xf0] sm:$0xff]
    %v214 = vld [vmem:[#allocation7 + $0xf8] sm:$0xff]
    %v215 = vld [vmem:[#allocation7 + $0x100] sm:$0xff]
    %v216 = vld [vmem:[#allocation7 + $0x108] sm:$0xff]
    %v217 = vld [vmem:[#allocation7 + $0x110] sm:$0xff]
    %v218 = vld [vmem:[#allocation7 + $0x118] sm:$0xff]
    %v219 = vld [vmem:[#allocation7 + $0x120] sm:$0xff]
    %v220 = vld [vmem:[#allocation7 + $0x128] sm:$0xff]
    %v221 = vld [vmem:[#allocation7 + $0x130] sm:$0xff]
    %v222 = vld [vmem:[#allocation7 + $0x138] sm:$0xff]
    %v223 = vld [vmem:[#allocation7 + $0x140] sm:$0xff]
    %v224 = vld [vmem:[#allocation7 + $0x148] sm:$0xff]
    %v225 = vld [vmem:[#allocation7 + $0x150] sm:$0xff]
    %v226 = vld [vmem:[#allocation7 + $0x158] sm:$0xff]
    %v227 = vld [vmem:[#allocation7 + $0x160] sm:$0xff]
    %v228 = vld [vmem:[#allocation7 + $0x168] sm:$0xff]
    %v229 = vld [vmem:[#allocation7 + $0x170] sm:$0xff]
    %v230 = vld [vmem:[#allocation7 + $0x178] sm:$0xff]
    %v231 = vld [vmem:[#allocation7 + $0x180] sm:$0xff]
    %v232 = vld [vmem:[#allocation7 + $0x188] sm:$0xff]
    %v233 = vld [vmem:[#allocation7 + $0x190] sm:$0xff]
    %v234 = vld [vmem:[#allocation7 + $0x198] sm:$0xff]
    %v235 = vld [vmem:[#allocation7 + $0x1a0] sm:$0xff]
    %v236 = vld [vmem:[#allocation7 + $0x1a8] sm:$0xff]
    %v237 = vld [vmem:[#allocation7 + $0x1b0] sm:$0xff]
    %v238 = vld [vmem:[#allocation7 + $0x1b8] sm:$0xff]
    %v239 = vld [vmem:[#allocation7 + $0x1c0] sm:$0xff]
    %v240 = vld [vmem:[#allocation7 + $0x1c8] sm:$0xff]
    %v241 = vld [vmem:[#allocation7 + $0x1d0] sm:$0xff]
    %v242 = vld [vmem:[#allocation7 + $0x1d8] sm:$0xff]
    %v243 = vld [vmem:[#allocation7 + $0x1e0] sm:$0xff]
    %v244 = vld [vmem:[#allocation7 + $0x1e8] sm:$0xff]
    %v245 = vld [vmem:[#allocation7 + $0x1f0] sm:$0xff]
    %v246 = vld [vmem:[#allocation7 + $0x1f8] sm:$0xff]
    %v247 = vld [vmem:[%s4] sm:$0x3]
    %v249 = vperm.slane %v247, 0
    %v250 = vperm.slane %v247, 1
    %253 = vmatpush.msra.mxu0 %v213
    %254 = vmatpush.msra.mxu0 %v211
    %255 = vmatpush.msra.mxu0 %v209
    %256 = vmatpush.msra.mxu0 %v207
    %257 = vmatpush.msra.mxu0 %v205
    %258 = vmatpush.msra.mxu0 %v203
    %259 = vmatpush.msra.mxu0 %v201
    %260 = vmatpush.msra.mxu0 %v199
    %261 = vmatpush.msra.mxu0 %v197
    %262 = vmatpush.msra.mxu0 %v195
    %263 = vmatpush.msra.mxu0 %v193
    %264 = vmatpush.msra.mxu0 %v191
    %265 = vmatpush.msra.mxu0 %v189
    %266 = vmatpush.msra.mxu0 %v187
    %267 = vmatpush.msra.mxu0 %v185
    %268 = vmatpush.msra.mxu0 %v183
    %269 = vmatmul.f32.gmra.mxu0 %v181
    %v270 = vpop.f32.mrf.mxu0
    %v271 = vadd.f32 %v249, %v270
    %272 = vdwg.mxu0
    %273 = vmatpush.msra.mxu0 %v245
    %274 = vmatpush.msra.mxu0 %v243
    %275 = vmatpush.msra.mxu0 %v241
    %276 = vmatpush.msra.mxu0 %v239
    %277 = vmatpush.msra.mxu0 %v237
    %278 = vmatpush.msra.mxu0 %v235
    %279 = vmatpush.msra.mxu0 %v233
    %280 = vmatpush.msra.mxu0 %v231
    %281 = vmatpush.msra.mxu0 %v229
    %282 = vmatpush.msra.mxu0 %v227
    %283 = vmatpush.msra.mxu0 %v225
    %284 = vmatpush.msra.mxu0 %v223
    %285 = vmatpush.msra.mxu0 %v221
    %286 = vmatpush.msra.mxu0 %v219
    %287 = vmatpush.msra.mxu0 %v217
    %288 = vmatpush.msra.mxu0 %v215
    %289 = vmatmul.f32.gmra.mxu0 %v182
    %v290 = vpop.f32.mrf.mxu0
    %v291 = vadd.f32 %v271, %v290
    %292 = vdwg.mxu0
    %293 = vmatpush.msra.mxu0 %v214
    %294 = vmatpush.msra.mxu0 %v212
    %295 = vmatpush.msra.mxu0 %v210
    %296 = vmatpush.msra.mxu0 %v208
    %297 = vmatpush.msra.mxu0 %v206
    %298 = vmatpush.msra.mxu0 %v204
    %299 = vmatpush.msra.mxu0 %v202
    %300 = vmatpush.msra.mxu0 %v200
    %301 = vmatpush.msra.mxu0 %v198
    %302 = vmatpush.msra.mxu0 %v196
    %303 = vmatpush.msra.mxu0 %v194
    %304 = vmatpush.msra.mxu0 %v192
    %305 = vmatpush.msra.mxu0 %v190
    %306 = vmatpush.msra.mxu0 %v188
    %307 = vmatpush.msra.mxu0 %v186
    %308 = vmatpush.msra.mxu0 %v184
    %309 = vmatmul.f32.gmra.mxu0 %v181
    %v310 = vpop.f32.mrf.mxu0
    %v311 = vadd.f32 %v250, %v310
    %312 = vdwg.mxu0
    %313 = vmatpush.msra.mxu0 %v246
    %314 = vmatpush.msra.mxu0 %v244
    %315 = vmatpush.msra.mxu0 %v242
    %316 = vmatpush.msra.mxu0 %v240
    %317 = vmatpush.msra.mxu0 %v238
    %318 = vmatpush.msra.mxu0 %v236
    %319 = vmatpush.msra.mxu0 %v234
    %320 = vmatpush.msra.mxu0 %v232
    %321 = vmatpush.msra.mxu0 %v230
    %322 = vmatpush.msra.mxu0 %v228
    %323 = vmatpush.msra.mxu0 %v226
    %324 = vmatpush.msra.mxu0 %v224
    %325 = vmatpush.msra.mxu0 %v222
    %326 = vmatpush.msra.mxu0 %v220
    %327 = vmatpush.msra.mxu0 %v218
    %328 = vmatpush.msra.mxu0 %v216
    %329 = vmatmul.f32.gmra.mxu0 %v182
    %v330 = vpop.f32.mrf.mxu0
    %v331 = vadd.f32 %v311, %v330
    %332 = vdwg.mxu0
    %v333 = vmax.f32 %v291, 0.0
    %v334 = vmax.f32 %v331, 0.0
    %v335 = vld [vmem:[#allocation9] sm:$0xff]
    %v336 = vld [vmem:[#allocation9 + $0x8] sm:$0xff]
    %v337 = vld [vmem:[#allocation9 + $0x10] sm:$0xff]
    %v338 = vld [vmem:[#allocation9 + $0x18] sm:$0xff]
    %v339 = vld [vmem:[#allocation9 + $0x20] sm:$0xff]
    %v340 = vld [vmem:[#allocation9 + $0x28] sm:$0xff]
    %v341 = vld [vmem:[#allocation9 + $0x30] sm:$0xff]
    %v342 = vld [vmem:[#allocation9 + $0x38] sm:$0xff]
    %v343 = vld [vmem:[#allocation9 + $0x40] sm:$0xff]
    %v344 = vld [vmem:[#allocation9 + $0x48] sm:$0xff]
    %v345 = vld [vmem:[#allocation9 + $0x50] sm:$0xff]
    %v346 = vld [vmem:[#allocation9 + $0x58] sm:$0xff]
    %v347 = vld [vmem:[#allocation9 + $0x60] sm:$0xff]
    %v348 = vld [vmem:[#allocation9 + $0x68] sm:$0xff]
    %v349 = vld [vmem:[#allocation9 + $0x70] sm:$0xff]
    %v350 = vld [vmem:[#allocation9 + $0x78] sm:$0xff]
    %v351 = vld [vmem:[#allocation9 + $0x80] sm:$0xff]
    %v352 = vld [vmem:[#allocation9 + $0x88] sm:$0xff]
    %v353 = vld [vmem:[#allocation9 + $0x90] sm:$0xff]
    %v354 = vld [vmem:[#allocation9 + $0x98] sm:$0xff]
    %v355 = vld [vmem:[#allocation9 + $0xa0] sm:$0xff]
    %v356 = vld [vmem:[#allocation9 + $0xa8] sm:$0xff]
    %v357 = vld [vmem:[#allocation9 + $0xb0] sm:$0xff]
    %v358 = vld [vmem:[#allocation9 + $0xb8] sm:$0xff]
    %v359 = vld [vmem:[#allocation9 + $0xc0] sm:$0xff]
    %v360 = vld [vmem:[#allocation9 + $0xc8] sm:$0xff]
    %v361 = vld [vmem:[#allocation9 + $0xd0] sm:$0xff]
    %v362 = vld [vmem:[#allocation9 + $0xd8] sm:$0xff]
    %v363 = vld [vmem:[#allocation9 + $0xe0] sm:$0xff]
    %v364 = vld [vmem:[#allocation9 + $0xe8] sm:$0xff]
    %v365 = vld [vmem:[#allocation9 + $0xf0] sm:$0xff]
    %v366 = vld [vmem:[#allocation9 + $0xf8] sm:$0xff]
    %v367 = vld [vmem:[#allocation9 + $0x100] sm:$0xff]
    %v368 = vld [vmem:[#allocation9 + $0x108] sm:$0xff]
    %v369 = vld [vmem:[#allocation9 + $0x110] sm:$0xff]
    %v370 = vld [vmem:[#allocation9 + $0x118] sm:$0xff]
    %v371 = vld [vmem:[#allocation9 + $0x120] sm:$0xff]
    %v372 = vld [vmem:[#allocation9 + $0x128] sm:$0xff]
    %v373 = vld [vmem:[#allocation9 + $0x130] sm:$0xff]
    %v374 = vld [vmem:[#allocation9 + $0x138] sm:$0xff]
    %v375 = vld [vmem:[#allocation9 + $0x140] sm:$0xff]
    %v376 = vld [vmem:[#allocation9 + $0x148] sm:$0xff]
    %v377 = vld [vmem:[#allocation9 + $0x150] sm:$0xff]
    %v378 = vld [vmem:[#allocation9 + $0x158] sm:$0xff]
    %v379 = vld [vmem:[#allocation9 + $0x160] sm:$0xff]
    %v380 = vld [vmem:[#allocation9 + $0x168] sm:$0xff]
    %v381 = vld [vmem:[#allocation9 + $0x170] sm:$0xff]
    %v382 = vld [vmem:[#allocation9 + $0x178] sm:$0xff]
    %v383 = vld [vmem:[#allocation9 + $0x180] sm:$0xff]
    %v384 = vld [vmem:[#allocation9 + $0x188] sm:$0xff]
    %v385 = vld [vmem:[#allocation9 + $0x190] sm:$0xff]
    %v386 = vld [vmem:[#allocation9 + $0x198] sm:$0xff]
    %v387 = vld [vmem:[#allocation9 + $0x1a0] sm:$0xff]
    %v388 = vld [vmem:[#allocation9 + $0x1a8] sm:$0xff]
    %v389 = vld [vmem:[#allocation9 + $0x1b0] sm:$0xff]
    %v390 = vld [vmem:[#allocation9 + $0x1b8] sm:$0xff]
    %v391 = vld [vmem:[#allocation9 + $0x1c0] sm:$0xff]
    %v392 = vld [vmem:[#allocation9 + $0x1c8] sm:$0xff]
    %v393 = vld [vmem:[#allocation9 + $0x1d0] sm:$0xff]
    %v394 = vld [vmem:[#allocation9 + $0x1d8] sm:$0xff]
    %v395 = vld [vmem:[#allocation9 + $0x1e0] sm:$0xff]
    %v396 = vld [vmem:[#allocation9 + $0x1e8] sm:$0xff]
    %v397 = vld [vmem:[#allocation9 + $0x1f0] sm:$0xff]
    %v398 = vld [vmem:[#allocation9 + $0x1f8] sm:$0xff]
    %v399 = vld [vmem:[%s6] sm:$0x3]
    %v401 = vperm.slane %v399, 0
    %v402 = vperm.slane %v399, 1
    %405 = vmatpush.msra.mxu0 %v365
    %406 = vmatpush.msra.mxu0 %v363
    %407 = vmatpush.msra.mxu0 %v361
    %408 = vmatpush.msra.mxu0 %v359
    %409 = vmatpush.msra.mxu0 %v357
    %410 = vmatpush.msra.mxu0 %v355
    %411 = vmatpush.msra.mxu0 %v353
    %412 = vmatpush.msra.mxu0 %v351
    %413 = vmatpush.msra.mxu0 %v349
    %414 = vmatpush.msra.mxu0 %v347
    %415 = vmatpush.msra.mxu0 %v345
    %416 = vmatpush.msra.mxu0 %v343
    %417 = vmatpush.msra.mxu0 %v341
    %418 = vmatpush.msra.mxu0 %v339
    %419 = vmatpush.msra.mxu0 %v337
    %420 = vmatpush.msra.mxu0 %v335
    %421 = vmatmul.f32.gmra.mxu0 %v333
    %v422 = vpop.f32.mrf.mxu0
    %v423 = vadd.f32 %v401, %v422
    %424 = vdwg.mxu0
    %425 = vmatpush.msra.mxu0 %v397
    %426 = vmatpush.msra.mxu0 %v395
    %427 = vmatpush.msra.mxu0 %v393
    %428 = vmatpush.msra.mxu0 %v391
    %429 = vmatpush.msra.mxu0 %v389
    %430 = vmatpush.msra.mxu0 %v387
    %431 = vmatpush.msra.mxu0 %v385
    %432 = vmatpush.msra.mxu0 %v383
    %433 = vmatpush.msra.mxu0 %v381
    %434 = vmatpush.msra.mxu0 %v379
    %435 = vmatpush.msra.mxu0 %v377
    %436 = vmatpush.msra.mxu0 %v375
    %437 = vmatpush.msra.mxu0 %v373
    %438 = vmatpush.msra.mxu0 %v371
    %439 = vmatpush.msra.mxu0 %v369
    %440 = vmatpush.msra.mxu0 %v367
    %441 = vmatmul.f32.gmra.mxu0 %v334
    %v442 = vpop.f32.mrf.mxu0
    %v443 = vadd.f32 %v423, %v442
    %444 = vdwg.mxu0
    %445 = vmatpush.msra.mxu0 %v366
    %446 = vmatpush.msra.mxu0 %v364
    %447 = vmatpush.msra.mxu0 %v362
    %448 = vmatpush.msra.mxu0 %v360
    %449 = vmatpush.msra.mxu0 %v358
    %450 = vmatpush.msra.mxu0 %v356
    %451 = vmatpush.msra.mxu0 %v354
    %452 = vmatpush.msra.mxu0 %v352
    %453 = vmatpush.msra.mxu0 %v350
    %454 = vmatpush.msra.mxu0 %v348
    %455 = vmatpush.msra.mxu0 %v346
    %456 = vmatpush.msra.mxu0 %v344
    %457 = vmatpush.msra.mxu0 %v342
    %458 = vmatpush.msra.mxu0 %v340
    %459 = vmatpush.msra.mxu0 %v338
    %460 = vmatpush.msra.mxu0 %v336
    %461 = vmatmul.f32.gmra.mxu0 %v333
    %v462 = vpop.f32.mrf.mxu0
    %v463 = vadd.f32 %v402, %v462
    %464 = vdwg.mxu0
    %465 = vmatpush.msra.mxu0 %v398
    %466 = vmatpush.msra.mxu0 %v396
    %467 = vmatpush.msra.mxu0 %v394
    %468 = vmatpush.msra.mxu0 %v392
    %469 = vmatpush.msra.mxu0 %v390
    %470 = vmatpush.msra.mxu0 %v388
    %471 = vmatpush.msra.mxu0 %v386
    %472 = vmatpush.msra.mxu0 %v384
    %473 = vmatpush.msra.mxu0 %v382
    %474 = vmatpush.msra.mxu0 %v380
    %475 = vmatpush.msra.mxu0 %v378
    %476 = vmatpush.msra.mxu0 %v376
    %477 = vmatpush.msra.mxu0 %v374
    %478 = vmatpush.msra.mxu0 %v372
    %479 = vmatpush.msra.mxu0 %v370
    %480 = vmatpush.msra.mxu0 %v368
    %481 = vmatmul.f32.gmra.mxu0 %v334
    %v482 = vpop.f32.mrf.mxu0
    %v483 = vadd.f32 %v463, %v482
    %484 = vdwg.mxu0
    %v485 = vmax.f32 %v443, 0.0
    %v486 = vmax.f32 %v483, 0.0
    %v487 = vld [vmem:[#allocation10] sm:$0xff]
    %v488 = vld [vmem:[#allocation10 + $0x8] sm:$0xff]
    %v489 = vld [vmem:[#allocation10 + $0x10] sm:$0xff]
    %v490 = vld [vmem:[#allocation10 + $0x18] sm:$0xff]
    %v491 = vld [vmem:[#allocation10 + $0x20] sm:$0xff]
    %v492 = vld [vmem:[#allocation10 + $0x28] sm:$0xff]
    %v493 = vld [vmem:[#allocation10 + $0x30] sm:$0xff]
    %v494 = vld [vmem:[#allocation10 + $0x38] sm:$0xff]
    %v495 = vld [vmem:[#allocation10 + $0x40] sm:$0xff]
    %v496 = vld [vmem:[#allocation10 + $0x48] sm:$0xff]
    %v497 = vld [vmem:[#allocation10 + $0x50] sm:$0xff]
    %v498 = vld [vmem:[#allocation10 + $0x58] sm:$0xff]
    %v499 = vld [vmem:[#allocation10 + $0x60] sm:$0xff]
    %v500 = vld [vmem:[#allocation10 + $0x68] sm:$0xff]
    %v501 = vld [vmem:[#allocation10 + $0x70] sm:$0xff]
    %v502 = vld [vmem:[#allocation10 + $0x78] sm:$0xff]
    %v503 = vld [vmem:[#allocation10 + $0x80] sm:$0xff]
    %v504 = vld [vmem:[#allocation10 + $0x88] sm:$0xff]
    %v505 = vld [vmem:[#allocation10 + $0x90] sm:$0xff]
    %v506 = vld [vmem:[#allocation10 + $0x98] sm:$0xff]
    %v507 = vld [vmem:[#allocation10 + $0xa0] sm:$0xff]
    %v508 = vld [vmem:[#allocation10 + $0xa8] sm:$0xff]
    %v509 = vld [vmem:[#allocation10 + $0xb0] sm:$0xff]
    %v510 = vld [vmem:[#allocation10 + $0xb8] sm:$0xff]
    %v511 = vld [vmem:[#allocation10 + $0xc0] sm:$0xff]
    %v512 = vld [vmem:[#allocation10 + $0xc8] sm:$0xff]
    %v513 = vld [vmem:[#allocation10 + $0xd0] sm:$0xff]
    %v514 = vld [vmem:[#allocation10 + $0xd8] sm:$0xff]
    %v515 = vld [vmem:[#allocation10 + $0xe0] sm:$0xff]
    %v516 = vld [vmem:[#allocation10 + $0xe8] sm:$0xff]
    %v517 = vld [vmem:[#allocation10 + $0xf0] sm:$0xff]
    %v518 = vld [vmem:[#allocation10 + $0xf8] sm:$0xff]
    %v519 = vld [vmem:[%s8] sm:$0x1]
    %v521 = vperm.slane %v519, 0
    %523 = vmatpush.msra.mxu0 %v502
    %524 = vmatpush.msra.mxu0 %v501
    %525 = vmatpush.msra.mxu0 %v500
    %526 = vmatpush.msra.mxu0 %v499
    %527 = vmatpush.msra.mxu0 %v498
    %528 = vmatpush.msra.mxu0 %v497
    %529 = vmatpush.msra.mxu0 %v496
    %530 = vmatpush.msra.mxu0 %v495
    %531 = vmatpush.msra.mxu0 %v494
    %532 = vmatpush.msra.mxu0 %v493
    %533 = vmatpush.msra.mxu0 %v492
    %534 = vmatpush.msra.mxu0 %v491
    %535 = vmatpush.msra.mxu0 %v490
    %536 = vmatpush.msra.mxu0 %v489
    %537 = vmatpush.msra.mxu0 %v488
    %538 = vmatpush.msra.mxu0 %v487
    %539 = vmatmul.f32.gmra.mxu0 %v485
    %v540 = vpop.f32.mrf.mxu0
    %v541 = vadd.f32 %v521, %v540
    %542 = vdwg.mxu0
    %543 = vmatpush.msra.mxu0 %v518
    %544 = vmatpush.msra.mxu0 %v517
    %545 = vmatpush.msra.mxu0 %v516
    %546 = vmatpush.msra.mxu0 %v515
    %547 = vmatpush.msra.mxu0 %v514
    %548 = vmatpush.msra.mxu0 %v513
    %549 = vmatpush.msra.mxu0 %v512
    %550 = vmatpush.msra.mxu0 %v511
    %551 = vmatpush.msra.mxu0 %v510
    %552 = vmatpush.msra.mxu0 %v509
    %553 = vmatpush.msra.mxu0 %v508
    %554 = vmatpush.msra.mxu0 %v507
    %555 = vmatpush.msra.mxu0 %v506
    %556 = vmatpush.msra.mxu0 %v505
    %557 = vmatpush.msra.mxu0 %v504
    %558 = vmatpush.msra.mxu0 %v503
    %559 = vmatmul.f32.gmra.mxu0 %v486
    %v560 = vpop.f32.mrf.mxu0
    %v561 = vadd.f32 %v541, %v560
    %562 = vdwg.mxu0
    %v563 = vlaneseq
    %v564 = vand.u32 %v563, 127
    %v565 = vtanh.pop %v561
    %v566 = vmul.f32 %v565, 11.0
    %v567 = vadd.f32 %v566, -9.0
    %vm568 = vcmp.ge.s32.totalorder %v564, 64
    %v569 = vsel %vm568, %v567, %v561
    %570 = vst [vmem:[%s9] sm:$0xff] %v569
    // Predicated region
    $region62: #{actor_forward.1} parent=1 // pred_check
      _
    $region63: #{actor_forward.1} parent=1 // pred_check_branch
      %572 = sbr.rel (0) target = $region65
    $region64: #{actor_forward.1} parent=1 // pred_region
      _
    $region65: #{actor_forward.1} parent=1 // pred_fallthru
      _
    // Predicated region
    $region66: #{actor_forward.1} parent=1 // pred_check
      _
    $region67: #{actor_forward.1} parent=1 // pred_check_branch
      %574 = sbr.rel (0) target = $region69
    $region68: #{actor_forward.1} parent=1 // pred_region
      _
    $region69: #{actor_forward.1} parent=1 // pred_fallthru
      _
    %575 = vsyncpa [#allocation3], 1
    %576 = vsyncpa [#allocation5], 1
    %577 = vsyncpa [#allocation8], 1
    %578 = vsyncpa [#allocation11], 1

</llo_original>
